<compile_context>
chip_gen: v6e
topology: v6e:2x2x1
jax: 0.10.0
libtpu: 0.0.40
codegen_flags: <defaults>
</compile_context>

<pallas_src>
import jax
import jax.numpy as jnp
from jax.experimental import pallas as pl
from jax.experimental.pallas import tpu as pltpu


def _mish_kernel(x_ref, o_ref):
    x = x_ref[...].astype(jnp.float32)
    t = 1.0 + jnp.exp(x)
    # mish(x) = x * tanh(softplus(x)) = x * (1 - 2 / ((1 + e^x)^2 + 1))
    y = x * (1.0 - 2.0 / (t * t + 1.0))
    o_ref[...] = y.astype(o_ref.dtype)


def mish(x, *, target_block_bytes=2 * 1024 * 1024):
    """Apply Mish elementwise; accepts any shape/dtype, returns same."""
    orig_shape = x.shape
    orig_dtype = x.dtype
    n = x.size
    itemsize = jnp.dtype(orig_dtype).itemsize

    xf = jnp.ravel(x)

    # Pick the widest lane dim that divides n -> no padding copy required.
    lanes = None
    for cand in (1024, 512, 256, 128):
        if n % cand == 0:
            lanes = cand
            break
    if lanes is None:
        # Fallback: minimal pad to an (8 * lanes)-element boundary (< 16 KiB).
        lanes = 512
        chunk = 8 * lanes
        n_pad = ((n + chunk - 1) // chunk) * chunk
        xf = jnp.pad(xf, (0, n_pad - n))
    else:
        n_pad = n

    rows = n_pad // lanes
    x2d = xf.reshape(rows, lanes)

    # ~target_block_bytes per block; rows rounded to a multiple of 32 so
    # packed sub-32-bit dtypes also tile cleanly; clamped to the array size.
    tile_rows = max(32, (target_block_bytes // (lanes * itemsize)) // 32 * 32)
    block_rows = min(tile_rows, rows)
    grid = (pl.cdiv(rows, block_rows),)

    out2d = pl.pallas_call(
        _mish_kernel,
        out_shape=jax.ShapeDtypeStruct((rows, lanes), orig_dtype),
        grid_spec=pltpu.PrefetchScalarGridSpec(
            num_scalar_prefetch=0,
            grid=grid,
            in_specs=[pl.BlockSpec((block_rows, lanes), lambda i: (i, 0))],
            out_specs=pl.BlockSpec((block_rows, lanes), lambda i: (i, 0)),
        ),
        compiler_params=pltpu.CompilerParams(
            dimension_semantics=("parallel",),
        ),
        cost_estimate=pl.CostEstimate(
            flops=6 * n,
            transcendentals=2 * n,
            bytes_accessed=2 * n * itemsize,
        ),
    )(x2d)

    if n_pad != n:
        return out2d.reshape(-1)[:n].reshape(orig_shape)
    return out2d.reshape(orig_shape)


def mish_ref(x):
    xf = x.astype(jnp.float32)
    return (xf * jnp.tanh(jax.nn.softplus(xf))).astype(x.dtype)


if __name__ == "__main__":
    key = jax.random.PRNGKey(0)
    x = jax.random.normal(key, (2, 4, 16, 16), dtype=jnp.float32)

    out = mish(x)
    out = jax.block_until_ready(out)

    ref = mish_ref(x)
    assert out.shape == x.shape and out.dtype == x.dtype
    assert jnp.allclose(out, ref, atol=1e-5, rtol=1e-5), float(
        jnp.max(jnp.abs(out - ref))
    )
    print("KERNEL_OK")
</pallas_src>

<mosaic_0001>
module attributes {stable_mosaic.version = 11 : i64} {
  func.func @_mish_kernel(%arg0: i32, %arg1: memref<2x1024xf32, #tpu.memory_space<vmem>>, %arg2: memref<2x1024xf32, #tpu.memory_space<vmem>>) attributes {dimension_semantics = [#tpu.dimension_semantics<parallel>], iteration_bounds = array<i64: 1>, scalar_prefetch = 0 : i64, scratch_operands = 0 : i64, tpu.core_type = #tpu.core_type<tc>, window_params = [{transform_indices = @transform_0, window_bounds = array<i64: 2, 1024>}, {transform_indices = @transform_1, window_bounds = array<i64: 2, 1024>}]} {
    %c0 = arith.constant 0 : index
    %c0_0 = arith.constant 0 : index
    %0 = vector.load %arg1[%c0, %c0_0] : memref<2x1024xf32, #tpu.memory_space<vmem>>, vector<2x1024xf32>
    %1 = math.exp %0 : vector<2x1024xf32>
    %cst = arith.constant 1.000000e+00 : f32
    %2 = vector.broadcast %cst : f32 to vector<2x1024xf32>
    %3 = arith.addf %2, %1 : vector<2x1024xf32>
    %4 = arith.mulf %3, %3 : vector<2x1024xf32>
    %cst_1 = arith.constant 1.000000e+00 : f32
    %5 = vector.broadcast %cst_1 : f32 to vector<2x1024xf32>
    %6 = arith.addf %4, %5 : vector<2x1024xf32>
    %cst_2 = arith.constant 2.000000e+00 : f32
    %7 = vector.broadcast %cst_2 : f32 to vector<2x1024xf32>
    %8 = arith.divf %7, %6 : vector<2x1024xf32>
    %cst_3 = arith.constant 1.000000e+00 : f32
    %9 = vector.broadcast %cst_3 : f32 to vector<2x1024xf32>
    %10 = arith.subf %9, %8 : vector<2x1024xf32>
    %11 = arith.mulf %0, %10 : vector<2x1024xf32>
    %c0_4 = arith.constant 0 : index
    %c0_5 = arith.constant 0 : index
    %12 = vector.load %arg2[%c0_4, %c0_5] : memref<2x1024xf32, #tpu.memory_space<vmem>>, vector<2x1024xf32>
    tpu.vector_store %arg2[%c0_4, %c0_5], %11 {strides = array<i32>} : memref<2x1024xf32, #tpu.memory_space<vmem>>, vector<2x1024xf32>,
    return
  }
  func.func @transform_0(%arg0: i32) -> (i32, i32) {
    %c0_i32 = arith.constant 0 : i32
    %c0_i32_0 = arith.constant 0 : i32
    return %arg0, %c0_i32 : i32, i32
  }
  func.func @transform_1(%arg0: i32) -> (i32, i32) {
    %c0_i32 = arith.constant 0 : i32
    %c0_i32_0 = arith.constant 0 : i32
    return %arg0, %c0_i32 : i32, i32
  }
}

</mosaic_0001>

<llo_original>
// kernel: tpu_custom_call.1
$region0: #{tpu_custom_call.1}
  #allocation0 [shape = 'u32[]', space=smem, size = 0x4, offset = 0x4, fixed_abs, tag = 'smem constant byte address 0x4 - core index']
  #allocation1 [shape = 'u32[144,128]{1,0:T(1,128)}', space=vmem, size = 0x12000, scoped, tag = 'internal scratch']
  %s0 = inlined_call_operand.hbm [shape: f32[2,1024], index: 0, kind: input, shape index: {}]
  %s1 = inlined_call_operand.hbm [shape: f32[2,1024], index: 1, kind: output, shape index: {}]
  %s2 = sld [smem:[#allocation0]]
  $region18: #{tpu_custom_call.1} parent=0
    _
  %s4 = ssub.s32 1, %s2
  %s5 = scalar_select 0, %s4, %s2
  $region1: #{tpu_custom_call.1} parent=0
    #allocation2 [shape = 'u8[8192]{0}', space=vmem, size = 0x2000, scoped, tag = 'input window, operand 0, single buffered']
    #allocation3 [shape = 's32[1]{0}', space=sflag, size = 0x4, scoped, tag = 'scoped memory for tpu_custom_call.1']
    #allocation4 [shape = 's32[1]{0}', space=sflag, size = 0x4, scoped, tag = 'scoped memory for tpu_custom_call.1']
    #allocation5 [shape = 'u8[8192]{0}', space=vmem, size = 0x2000, scoped, tag = 'output window, operand 0, single buffered']
    %6 = vsyncpa [#allocation3], 0
    %7 = vsyncpa [#allocation4], 0
    // Predicated region
    $region2: #{tpu_custom_call.1} parent=1 // pred_check
      _
    $region3: #{tpu_custom_call.1} parent=1 // pred_check_branch
      %9 = sbr.rel (0) target = $region5
    $region4: #{tpu_custom_call.1} parent=1 // pred_region
      %s11 = ssub.s32 256, 256
      %12 = vsyncadd [#allocation3], %s11
      %s14 = sshll.u32 [#allocation2], 4
      %s15 = int_to_ptr.vmem [resolvable:$true] %s14
      %17 = dma.hbm_to_vmem [thread:$0]  %s0, 256, %s15, [#allocation3]
    $region5: #{tpu_custom_call.1} parent=1 // pred_fallthru
      _
    // Predicated region
    $region6: #{tpu_custom_call.1} parent=1 // pred_check
      _
    $region7: #{tpu_custom_call.1} parent=1 // pred_check_branch
      %19 = sbr.rel (0) target = $region9
    $region8: #{tpu_custom_call.1} parent=1 // pred_region
      %20 = dma.done [#allocation3], 256
    $region9: #{tpu_custom_call.1} parent=1 // pred_fallthru
      _
    %v21 = vld [vmem:[#allocation2] sm:$0xff]
    %v22 = vld [vmem:[#allocation2 + $0x8] sm:$0xff]
    %v23 = vmul.f32 %v21, 1.442695
    %v24 = vpow.pop %v23
    %v25 = vmul.f32 %v22, 1.442695
    %v26 = vpow.pop %v25
    %v27 = vadd.f32 %v24, 1.0
    %v28 = vadd.f32 %v26, 1.0
    %v29 = vmul.f32 %v27, %v27
    %v30 = vmul.f32 %v28, %v28
    %v31 = vadd.f32 %v29, 1.0
    %v32 = vadd.f32 %v30, 1.0
    %v33 = vrcp.pop %v31
    %v34 = vmul.f32 2.0, %v33
    %v35 = vrcp.pop %v32
    %v36 = vmul.f32 2.0, %v35
    %v37 = vsub.f32 1.0, %v34
    %v38 = vsub.f32 1.0, %v36
    %v39 = vmul.f32 %v21, %v37
    %v40 = vmul.f32 %v22, %v38
    %41 = vst [vmem:[#allocation5] sm:$0xff] %v39
    %42 = vst [vmem:[#allocation5 + $0x8] sm:$0xff] %v40
    // Predicated region
    $region10: #{tpu_custom_call.1} parent=1 // pred_check
      _
    $region11: #{tpu_custom_call.1} parent=1 // pred_check_branch
      %44 = sbr.rel (0) target = $region13
    $region12: #{tpu_custom_call.1} parent=1 // pred_region
      %s46 = ssub.s32 256, 256
      %47 = vsyncadd [#allocation4], %s46
      %s49 = sshll.u32 [#allocation5], 4
      %s50 = int_to_ptr.vmem [resolvable:$true] %s49
      %52 = dma.vmem_to_hbm [thread:$0]  %s50, 256, %s1, [#allocation4]
    $region13: #{tpu_custom_call.1} parent=1 // pred_fallthru
      _
    // Predicated region
    $region14: #{tpu_custom_call.1} parent=1 // pred_check
      _
    $region15: #{tpu_custom_call.1} parent=1 // pred_check_branch
      %54 = sbr.rel (0) target = $region17
    $region16: #{tpu_custom_call.1} parent=1 // pred_region
      %55 = dma.done [#allocation4], 256
    $region17: #{tpu_custom_call.1} parent=1 // pred_fallthru
      _
    %56 = vsyncpa [#allocation3], 1
    %57 = vsyncpa [#allocation4], 1

</llo_original>
